<compile_context>
chip_gen: v7x
topology: tpu7x:2x2x1
jax: 0.10.0
libtpu: 0.0.40
codegen_flags: <defaults>
</compile_context>

<pallas_src>
import functools

import jax
import jax.numpy as jnp
from jax import lax
from jax.experimental import pallas as pl
from jax.experimental.pallas import tpu as pltpu


def _round_up(a, m):
    return (a + m - 1) // m * m


def _attn_pool_kernel(x_ref, w_ref, o_ref, m_sc, l_sc, acc_sc, *,
                      seq_len, tile_s, padded_seq):
    k = pl.program_id(0)

    @pl.when(k == 0)
    def _():
        m_sc[...] = jnp.full_like(m_sc, -jnp.inf)
        l_sc[...] = jnp.zeros_like(l_sc)
        acc_sc[...] = jnp.zeros_like(acc_sc)

    x = x_ref[...]                      # (tile_s, F), native dtype — no f32 copy of the tile
    w = w_ref[...]                      # (F, 1), native dtype (resident: same block every step)

    # scores = x @ W^T  (bias omitted: softmax is shift-invariant) -> (tile_s, 1), f32 acc on MXU
    scores = jnp.dot(x, w, preferred_element_type=jnp.float32)

    if padded_seq != seq_len:           # static: mask only emitted when the last tile is padded
        row = k * tile_s + lax.broadcasted_iota(jnp.int32, (tile_s, 1), 0)
        scores = jnp.where(row < seq_len, scores, -jnp.inf)

    # Online softmax update over the sequence axis.
    m_prev = m_sc[...]                                               # (1, 1)
    m_new = jnp.maximum(m_prev, jnp.max(scores, axis=0, keepdims=True))
    alpha = jnp.exp(m_prev - m_new)                                  # (1, 1)
    p = jnp.exp(scores - m_new)                                      # (tile_s, 1)

    l_sc[...] = alpha * l_sc[...] + jnp.sum(p, axis=0, keepdims=True)
    # Weighted sum over the sequence on the MXU: contract dim 0 -> (1, F), f32 accumulate.
    pooled = lax.dot_general(p.astype(x.dtype), x,
                             (((0,), (0,)), ((), ())),
                             preferred_element_type=jnp.float32)
    acc_sc[...] = alpha * acc_sc[...] + pooled
    m_sc[...] = m_new

    @pl.when(k == pl.num_programs(0) - 1)
    def _():
        # Single (1,1) reciprocal applied once at the end; exact so f32 matches ref at 1e-5.
        inv_l = pl.reciprocal(l_sc[...], approx=False)
        o_ref[...] = (acc_sc[...] * inv_l).astype(o_ref.dtype)


def attention_pooling(x, w, b, output_len, *, tile_s=None):
    """x: (seq_len, feature_dim); w: (feature_dim, 1); b: (1, 1) — unused inside the kernel
    because softmax is shift-invariant (Linear bias is a mathematical no-op here)."""
    del b
    seq_len, feat_dim = x.shape
    itemsize = jnp.dtype(x.dtype).itemsize

    if tile_s is None:
        # ~8 MiB per x tile -> ~16-20 MiB with double-buffering: fits v7x's 64 MiB VMEM and is
        # large enough (>=512 rows for F<=4096 f32) to sit near the HBM roofline on v5e/v6e.
        budget_bytes = 8 * 1024 * 1024
        tile_s = budget_bytes // max(1, feat_dim * itemsize)
        tile_s = max(8, min(2048, (tile_s // 8) * 8))
    tile_s = min(tile_s, _round_up(seq_len, 8))
    tile_s = max(8, (tile_s // 8) * 8)

    padded_seq = _round_up(seq_len, tile_s)
    if padded_seq != seq_len:
        x = jnp.pad(x, ((0, padded_seq - seq_len), (0, 0)))   # zero pad; masked to -inf in-kernel
    grid = (padded_seq // tile_s,)

    x_tile_bytes = tile_s * feat_dim * itemsize
    vmem_limit = int(min(40 * 1024 * 1024,
                         max(16 * 1024 * 1024,
                             int(2.5 * x_tile_bytes) + 2 * 1024 * 1024)))

    kernel = functools.partial(_attn_pool_kernel, seq_len=seq_len, tile_s=tile_s,
                               padded_seq=padded_seq)

    pooled = pl.pallas_call(
        kernel,
        out_shape=jax.ShapeDtypeStruct((1, feat_dim), x.dtype),
        grid_spec=pltpu.PrefetchScalarGridSpec(
            num_scalar_prefetch=0,
            grid=grid,
            in_specs=[
                pl.BlockSpec((tile_s, feat_dim), lambda k: (k, 0)),   # streamed seq tiles
                pl.BlockSpec((feat_dim, 1), lambda k: (0, 0)),        # resident weight column
            ],
            out_specs=pl.BlockSpec((1, feat_dim), lambda k: (0, 0)),  # resident accumulator row
            scratch_shapes=[
                pltpu.VMEM((1, 1), jnp.float32),          # running max m
                pltpu.VMEM((1, 1), jnp.float32),          # running denom l
                pltpu.VMEM((1, feat_dim), jnp.float32),   # running weighted sum
            ],
        ),
        compiler_params=pltpu.CompilerParams(
            dimension_semantics=("arbitrary",),           # sequence axis is a reduction
            vmem_limit_bytes=vmem_limit,
        ),
    )(x, w)

    # Replicate outside the kernel: no redundant duplicated-row HBM writes from the kernel.
    return jnp.broadcast_to(pooled, (output_len, feat_dim))


def attention_pooling_ref(x, w, b, output_len):
    scores = x @ w + b                                   # (S, 1)
    weights = jax.nn.softmax(scores, axis=0)             # (S, 1)
    pooled = jnp.sum(x * weights, axis=0)                # (F,)
    return jnp.tile(pooled[None, :], (output_len, 1))


if __name__ == "__main__":
    key = jax.random.PRNGKey(0)
    kx, kw, kb, kx2 = jax.random.split(key, 4)

    # Case 1: small shapes implied by the module's forward.
    seq_len, feature_dim, output_len = 8, 32, 4
    x = jax.random.normal(kx, (seq_len, feature_dim), dtype=jnp.float32)
    w = jax.random.normal(kw, (feature_dim, 1), dtype=jnp.float32) * (1.0 / jnp.sqrt(feature_dim))
    b = jax.random.normal(kb, (1, 1), dtype=jnp.float32) * 0.01

    out = jax.block_until_ready(attention_pooling(x, w, b, output_len))
    ref = attention_pooling_ref(x, w, b, output_len)
    assert out.shape == (output_len, feature_dim)
    assert jnp.allclose(out, ref, atol=1e-5, rtol=1e-5), "mismatch vs reference (case 1)"

    # Case 2: ragged seq length — exercises multi-tile online softmax + padded-row masking.
    seq_len2, feature_dim2, output_len2 = 20, 128, 3
    x2 = jax.random.normal(kx2, (seq_len2, feature_dim2), dtype=jnp.float32)
    w2 = jax.random.normal(kw, (feature_dim2, 1), dtype=jnp.float32) * (1.0 / jnp.sqrt(feature_dim2))

    out2 = jax.block_until_ready(attention_pooling(x2, w2, b, output_len2, tile_s=8))
    ref2 = attention_pooling_ref(x2, w2, b, output_len2)
    assert out2.shape == (output_len2, feature_dim2)
    assert jnp.allclose(out2, ref2, atol=1e-5, rtol=1e-5), "mismatch vs reference (case 2)"

    print("KERNEL_OK")
</pallas_src>

<mosaic_0001>
module attributes {stable_mosaic.version = 11 : i64} {
  func.func @_attn_pool_kernel(%arg0: i32, %arg1: memref<8x32xf32, #tpu.memory_space<vmem>>, %arg2: memref<32x1xf32, #tpu.memory_space<vmem>>, %arg3: memref<1x32xf32, #tpu.memory_space<vmem>>, %arg4: memref<1x1xf32, #tpu.memory_space<vmem>>, %arg5: memref<1x1xf32, #tpu.memory_space<vmem>>, %arg6: memref<1x32xf32, #tpu.memory_space<vmem>>) attributes {dimension_semantics = [#tpu.dimension_semantics<arbitrary>], iteration_bounds = array<i64: 1>, scalar_prefetch = 0 : i64, scratch_operands = 3 : i64, tpu.core_type = #tpu.core_type<tc>, window_params = [{transform_indices = @transform_0, window_bounds = array<i64: 8, 32>}, {pipeline_mode = #tpu.pipeline_mode<synchronous>, transform_indices = @transform_1, window_bounds = array<i64: 32, 1>}, {pipeline_mode = #tpu.pipeline_mode<synchronous>, transform_indices = @transform_2, window_bounds = array<i64: 1, 32>}]} {
    %c0_i32 = arith.constant 0 : i32
    %0 = arith.cmpi eq, %arg0, %c0_i32 : i32
    %1 = arith.extui %0 : i1 to i32
    %c0_i32_0 = arith.constant 0 : i32
    %2 = arith.cmpi ne, %1, %c0_i32_0 : i32
    scf.if %2 {
      %cst_21 = arith.constant 0xFF800000 : f32
      %31 = vector.broadcast %cst_21 : f32 to vector<1x1xf32>
      %c0_22 = arith.constant 0 : index
      %c0_23 = arith.constant 0 : index
      %32 = vector.load %arg4[%c0_22, %c0_23] : memref<1x1xf32, #tpu.memory_space<vmem>>, vector<1x1xf32>
      tpu.vector_store %arg4[%c0_22, %c0_23], %31 {strides = array<i32>} : memref<1x1xf32, #tpu.memory_space<vmem>>, vector<1x1xf32>,
      %cst_24 = arith.constant 0.000000e+00 : f32
      %33 = vector.broadcast %cst_24 : f32 to vector<1x1xf32>
      %c0_25 = arith.constant 0 : index
      %c0_26 = arith.constant 0 : index
      %34 = vector.load %arg5[%c0_25, %c0_26] : memref<1x1xf32, #tpu.memory_space<vmem>>, vector<1x1xf32>
      tpu.vector_store %arg5[%c0_25, %c0_26], %33 {strides = array<i32>} : memref<1x1xf32, #tpu.memory_space<vmem>>, vector<1x1xf32>,
      %cst_27 = arith.constant 0.000000e+00 : f32
      %35 = vector.broadcast %cst_27 : f32 to vector<1x32xf32>
      %c0_28 = arith.constant 0 : index
      %c0_29 = arith.constant 0 : index
      %36 = vector.load %arg6[%c0_28, %c0_29] : memref<1x32xf32, #tpu.memory_space<vmem>>, vector<1x32xf32>
      tpu.vector_store %arg6[%c0_28, %c0_29], %35 {strides = array<i32>} : memref<1x32xf32, #tpu.memory_space<vmem>>, vector<1x32xf32>,
    } else {
    }
    %c0 = arith.constant 0 : index
    %c0_1 = arith.constant 0 : index
    %3 = vector.load %arg1[%c0, %c0_1] : memref<8x32xf32, #tpu.memory_space<vmem>>, vector<8x32xf32>
    %c0_2 = arith.constant 0 : index
    %c0_3 = arith.constant 0 : index
    %4 = vector.load %arg2[%c0_2, %c0_3] : memref<32x1xf32, #tpu.memory_space<vmem>>, vector<32x1xf32>
    %cst = arith.constant dense<0.000000e+00> : vector<8x1xf32>
    %5 = tpu.matmul %3, %4, %cst {dimension_numbers = #tpu.dot_dimension_numbers<[1], [0], [0], [1], [0, 0, 1, 1], [], []>} : vector<8x32xf32>, vector<32x1xf32>, vector<8x1xf32> -> vector<8x1xf32>
    %c0_4 = arith.constant 0 : index
    %c0_5 = arith.constant 0 : index
    %6 = vector.load %arg4[%c0_4, %c0_5] : memref<1x1xf32, #tpu.memory_space<vmem>>, vector<1x1xf32>
    %cst_6 = arith.constant dense<0xFF800000> : vector<1xf32>
    %7 = vector.multi_reduction <maximumf>, %5, %cst_6 [0] : vector<8x1xf32> to vector<1xf32>
    %8 = vector.shape_cast %7 : vector<1xf32> to vector<1x1xf32>
    %9 = arith.maximumf %6, %8 : vector<1x1xf32>
    %10 = arith.subf %6, %9 : vector<1x1xf32>
    %11 = math.exp %10 : vector<1x1xf32>
    %12 = vector.broadcast %9 : vector<1x1xf32> to vector<8x1xf32>
    %13 = arith.subf %5, %12 : vector<8x1xf32>
    %14 = math.exp %13 : vector<8x1xf32>
    %c0_7 = arith.constant 0 : index
    %c0_8 = arith.constant 0 : index
    %15 = vector.load %arg5[%c0_7, %c0_8] : memref<1x1xf32, #tpu.memory_space<vmem>>, vector<1x1xf32>
    %16 = arith.mulf %11, %15 : vector<1x1xf32>
    %cst_9 = arith.constant dense<0.000000e+00> : vector<1xf32>
    %17 = vector.multi_reduction <add>, %14, %cst_9 [0] : vector<8x1xf32> to vector<1xf32>
    %18 = vector.shape_cast %17 : vector<1xf32> to vector<1x1xf32>
    %19 = arith.addf %16, %18 : vector<1x1xf32>
    %c0_10 = arith.constant 0 : index
    %c0_11 = arith.constant 0 : index
    %20 = vector.load %arg5[%c0_10, %c0_11] : memref<1x1xf32, #tpu.memory_space<vmem>>, vector<1x1xf32>
    tpu.vector_store %arg5[%c0_10, %c0_11], %19 {strides = array<i32>} : memref<1x1xf32, #tpu.memory_space<vmem>>, vector<1x1xf32>,
    %cst_12 = arith.constant dense<0.000000e+00> : vector<1x32xf32>
    %21 = tpu.matmul %14, %3, %cst_12 {dimension_numbers = #tpu.dot_dimension_numbers<[0], [0], [1], [1], [0, 1, 1, 1], [], []>} : vector<8x1xf32>, vector<8x32xf32>, vector<1x32xf32> -> vector<1x32xf32>
    %c0_13 = arith.constant 0 : index
    %c0_14 = arith.constant 0 : index
    %22 = vector.load %arg6[%c0_13, %c0_14] : memref<1x32xf32, #tpu.memory_space<vmem>>, vector<1x32xf32>
    %23 = vector.broadcast %11 : vector<1x1xf32> to vector<1x32xf32>
    %24 = arith.mulf %23, %22 : vector<1x32xf32>
    %25 = arith.addf %24, %21 : vector<1x32xf32>
    %c0_15 = arith.constant 0 : index
    %c0_16 = arith.constant 0 : index
    %26 = vector.load %arg6[%c0_15, %c0_16] : memref<1x32xf32, #tpu.memory_space<vmem>>, vector<1x32xf32>
    tpu.vector_store %arg6[%c0_15, %c0_16], %25 {strides = array<i32>} : memref<1x32xf32, #tpu.memory_space<vmem>>, vector<1x32xf32>,
    %c0_17 = arith.constant 0 : index
    %c0_18 = arith.constant 0 : index
    %27 = vector.load %arg4[%c0_17, %c0_18] : memref<1x1xf32, #tpu.memory_space<vmem>>, vector<1x1xf32>
    tpu.vector_store %arg4[%c0_17, %c0_18], %9 {strides = array<i32>} : memref<1x1xf32, #tpu.memory_space<vmem>>, vector<1x1xf32>,
    %c0_i32_19 = arith.constant 0 : i32
    %28 = arith.cmpi eq, %arg0, %c0_i32_19 : i32
    %29 = arith.extui %28 : i1 to i32
    %c0_i32_20 = arith.constant 0 : i32
    %30 = arith.cmpi ne, %29, %c0_i32_20 : i32
    scf.if %30 {
      %c0_21 = arith.constant 0 : index
      %c0_22 = arith.constant 0 : index
      %31 = vector.load %arg5[%c0_21, %c0_22] : memref<1x1xf32, #tpu.memory_space<vmem>>, vector<1x1xf32>
      %32 = tpu.reciprocal %31 : vector<1x1xf32> -> vector<1x1xf32>
      %c0_23 = arith.constant 0 : index
      %c0_24 = arith.constant 0 : index
      %33 = vector.load %arg6[%c0_23, %c0_24] : memref<1x32xf32, #tpu.memory_space<vmem>>, vector<1x32xf32>
      %34 = vector.broadcast %32 : vector<1x1xf32> to vector<1x32xf32>
      %35 = arith.mulf %33, %34 : vector<1x32xf32>
      %c0_25 = arith.constant 0 : index
      %c0_26 = arith.constant 0 : index
      %36 = vector.load %arg3[%c0_25, %c0_26] : memref<1x32xf32, #tpu.memory_space<vmem>>, vector<1x32xf32>
      tpu.vector_store %arg3[%c0_25, %c0_26], %35 {strides = array<i32>} : memref<1x32xf32, #tpu.memory_space<vmem>>, vector<1x32xf32>,
    } else {
    }
    return
  }
  func.func @transform_0(%arg0: i32) -> (i32, i32) {
    %c0_i32 = arith.constant 0 : i32
    %c0_i32_0 = arith.constant 0 : i32
    return %arg0, %c0_i32 : i32, i32
  }
  func.func @transform_1(%arg0: i32) -> (i32, i32) {
    %c0_i32 = arith.constant 0 : i32
    %c0_i32_0 = arith.constant 0 : i32
    %c0_i32_1 = arith.constant 0 : i32
    return %c0_i32, %c0_i32_0 : i32, i32
  }
  func.func @transform_2(%arg0: i32) -> (i32, i32) {
    %c0_i32 = arith.constant 0 : i32
    %c0_i32_0 = arith.constant 0 : i32
    %c0_i32_1 = arith.constant 0 : i32
    return %c0_i32, %c0_i32_0 : i32, i32
  }
}

</mosaic_0001>

<llo_original>
// kernel: tpu_custom_call.1
$region0: #{tpu_custom_call.1}
  #allocation0 [shape = 'u32[]', space=smem, size = 0x4, offset = 0x4, fixed_abs, tag = 'smem constant byte address 0x4 - core index']
  #allocation1 [shape = 'u32[144,128]{1,0:T(1,128)}', space=vmem, size = 0x12000, scoped, tag = 'internal scratch']
  #allocation2 [shape = 'f32[1,1]{1,0:T(1,128)}', space=vmem, size = 0x200, scoped, tag = 'scratch operand']
  #allocation3 [shape = 'f32[1,1]{1,0:T(1,128)}', space=vmem, size = 0x200, scoped, tag = 'scratch operand']
  #allocation4 [shape = 'f32[1,32]{1,0:T(1,128)}', space=vmem, size = 0x200, scoped, tag = 'scratch operand']
  %s0 = inlined_call_operand.vmem [shape: f32[8,32], index: 0, kind: input, shape index: {}]
  %s1 = inlined_call_operand.vmem [shape: f32[32,1], index: 1, kind: input, shape index: {}]
  %s2 = inlined_call_operand.hbm [shape: f32[1,32], index: 2, kind: output, shape index: {}]
  %s3 = sld [smem:[#allocation0]]
  $region26: #{tpu_custom_call.1} parent=0
    _
  %s5 = ssub.s32 1, %s3
  %s6 = scalar_select 0, %s5, %s3
  $region1: #{tpu_custom_call.1} parent=0
    #allocation5 [shape = 'u8[512]{0}', space=vmem, size = 0x400, scoped, tag = 'output window, operand 0, single buffered']
    #allocation6 [shape = 's32[1]{0}', space=sflag, size = 0x4, scoped, tag = 'scoped memory for tpu_custom_call.1']
    %7 = vsyncpa [#allocation6], 0
    // Predicated region
    $region2: #{tpu_custom_call.1} parent=1 // pred_check
      _
    $region3: #{tpu_custom_call.1} parent=1 // pred_check_branch
      %9 = sbr.rel (0) target = $region5
    $region4: #{tpu_custom_call.1} parent=1 // pred_region
      _
    $region5: #{tpu_custom_call.1} parent=1 // pred_fallthru
      _
    // Predicated region
    $region6: #{tpu_custom_call.1} parent=1 // pred_check
      _
    $region7: #{tpu_custom_call.1} parent=1 // pred_check_branch
      %11 = sbr.rel (0) target = $region9
    $region8: #{tpu_custom_call.1} parent=1 // pred_region
      _
    $region9: #{tpu_custom_call.1} parent=1 // pred_fallthru
      _
    %p12 = scmp.eq.s32.totalorder 0, 0
    // Predicated region
    $region10: #{tpu_custom_call.1} parent=1 // pred_check
      %p13 = pneg %p12
    $region11: #{tpu_custom_call.1} parent=1 // pred_check_branch
      %15 = sbr.rel (%p13) target = $region13
    $region12: #{tpu_custom_call.1} parent=1 // pred_region
      %vm16 = vcmask 0
      %17 = vst.msk [vmem:[#allocation2] sm:$0x1] %vm16, -inf
      %18 = vst.msk [vmem:[#allocation3] sm:$0x1] %vm16, 0.0
      %vm19 = vcmask 253952
      %20 = vst.msk [vmem:[#allocation4] sm:$0x1] %vm19, 0.0
    $region13: #{tpu_custom_call.1} parent=1 // pred_fallthru
      _
    %v21 = vld [vmem:[%s0] sm:$0xff]
    %v22 = vld [vmem:[%s1] sm:$0xff]
    %v23 = vld [vmem:[%s1 + $0x8] sm:$0xff]
    %v24 = vld [vmem:[%s1 + $0x10] sm:$0xff]
    %v25 = vld [vmem:[%s1 + $0x18] sm:$0xff]
    %vm26 = vcmask 261120
    %v28 = vsel %vm26, %v21, 0
    %30 = vmatprep.subr.mxu0 0.0
    %31 = vmatpush1.msra.mxu0 %v22
    %32 = vmatprep.subr.mxu0 0.0
    %33 = vmatpush1.msra.mxu0 %v23
    %34 = vmatprep.subr.mxu0 0.0
    %35 = vmatpush1.msra.mxu0 %v24
    %36 = vmatprep.subr.mxu0 0.0
    %37 = vmatpush1.msra.mxu0 %v25
    %38 = vmatprep.subr.mxu0 0.0
    %39 = vmatpush1.msra.mxu0 0.0
    %40 = vmatprep.subr.mxu0 0.0
    %41 = vmatpush1.msra.mxu0 0.0
    %42 = vmatprep.subr.mxu0 0.0
    %43 = vmatpush1.msra.mxu0 0.0
    %44 = vmatprep.subr.mxu0 0.0
    %45 = vmatpush1.msra.mxu0 0.0
    %46 = vmatprep.subr.mxu0 0.0
    %47 = vmatpush1.msra.mxu0 0.0
    %48 = vmatprep.subr.mxu0 0.0
    %49 = vmatpush1.msra.mxu0 0.0
    %50 = vmatprep.subr.mxu0 0.0
    %51 = vmatpush1.msra.mxu0 0.0
    %52 = vmatprep.subr.mxu0 0.0
    %53 = vmatpush1.msra.mxu0 0.0
    %54 = vmatprep.subr.mxu0 0.0
    %55 = vmatpush1.msra.mxu0 0.0
    %56 = vmatprep.subr.mxu0 0.0
    %57 = vmatpush1.msra.mxu0 0.0
    %58 = vmatprep.subr.mxu0 0.0
    %59 = vmatpush1.msra.mxu0 0.0
    %60 = vmatprep.subr.mxu0 0.0
    %61 = vmatpush1.msra.mxu0 0.0
    %62 = vmatprep.subr.mxu0 0.0
    %63 = vmatpush1.msra.mxu0 0.0
    %64 = vmatprep.subr.mxu0 0.0
    %65 = vmatpush1.msra.mxu0 0.0
    %66 = vmatprep.subr.mxu0 0.0
    %67 = vmatpush1.msra.mxu0 0.0
    %68 = vmatprep.subr.mxu0 0.0
    %69 = vmatpush1.msra.mxu0 0.0
    %70 = vmatprep.subr.mxu0 0.0
    %71 = vmatpush1.msra.mxu0 0.0
    %72 = vmatprep.subr.mxu0 0.0
    %73 = vmatpush1.msra.mxu0 0.0
    %74 = vmatprep.subr.mxu0 0.0
    %75 = vmatpush1.msra.mxu0 0.0
    %76 = vmatprep.subr.mxu0 0.0
    %77 = vmatpush1.msra.mxu0 0.0
    %78 = vmatprep.subr.mxu0 0.0
    %79 = vmatpush1.msra.mxu0 0.0
    %80 = vmatprep.subr.mxu0 0.0
    %81 = vmatpush1.msra.mxu0 0.0
    %82 = vmatprep.subr.mxu0 0.0
    %83 = vmatpush1.msra.mxu0 0.0
    %84 = vmatprep.subr.mxu0 0.0
    %85 = vmatpush1.msra.mxu0 0.0
    %86 = vmatprep.subr.mxu0 0.0
    %87 = vmatpush1.msra.mxu0 0.0
    %88 = vmatprep.subr.mxu0 0.0
    %89 = vmatpush1.msra.mxu0 0.0
    %90 = vmatprep.subr.mxu0 0.0
    %91 = vmatpush1.msra.mxu0 0.0
    %92 = vmatprep.subr.mxu0 0.0
    %93 = vmatpush1.msra.mxu0 0.0
    %94 = vmatprep.mubr.f32.mxu0 0.0
    %95 = vmatmul.mubr.f32.gmra.mrb[0].mxu0 %v28
    %v96 = vpop.f32.mrb[0].mxu0
    %v97 = vadd.f32 0.0, %v96
    %v98 = vpop.f32.mrb[0].mxu0
    %99 = vdwg.mxu0
    %v100 = vld [vmem:[#allocation2] sm:$0x1]
    %vm101 = vcmask 7168
    %v102 = vsel %vm101, %v97, -inf
    %v103 = vrot.slane %v102, 4
    %v104 = vmax.f32 %v102, %v103
    %v105 = vrot.slane %v104, 2
    %v106 = vmax.f32 %v104, %v105
    %v107 = vrot.slane %v106, 1
    %v108 = vmax.f32 %v106, %v107
    %v109 = vmax.f32 %v100, %v108
    %v110 = vsub.f32 %v100, %v109
    %v111 = vmul.f32 %v110, 1.442695
    %v112 = vpow.pop %v111
    %v114 = vlaneseq
    %v115 = vshrl.u32 %v114, 7
    %v116 = vsub.s32 0, %v115
    %v117 = vrot.slane %v109, %v116
    %v119 = vsub.f32 %v97, %v117
    %v120 = vmul.f32 %v119, 1.442695
    %v121 = vpow.pop %v120
    %v122 = vld [vmem:[#allocation3] sm:$0x1]
    %v123 = vmul.f32 %v112, %v122
    %v124 = vsel %vm101, %v121, 0.0
    %v125 = vrot.slane %v124, 4
    %v126 = vadd.f32 %v124, %v125
    %v127 = vrot.slane %v126, 2
    %v128 = vadd.f32 %v126, %v127
    %v129 = vrot.slane %v128, 1
    %v130 = vadd.f32 %v128, %v129
    %v131 = vadd.f32 %v123, %v130
    %vm132 = vcmask 0
    %133 = vst.msk [vmem:[#allocation3] sm:$0x1] %vm132, %v131
    %134 = vxpose.xlu0.b32.start [1/16] %v121, 128
    %135 = vxpose.xlu0.b32.cont [2/16] 0.0, 128
    %136 = vxpose.xlu0.b32.cont [3/16] 0.0, 128
    %137 = vxpose.xlu0.b32.cont [4/16] 0.0, 128
    %138 = vxpose.xlu0.b32.cont [5/16] 0.0, 128
    %139 = vxpose.xlu0.b32.cont [6/16] 0.0, 128
    %140 = vxpose.xlu0.b32.cont [7/16] 0.0, 128
    %141 = vxpose.xlu0.b32.cont [8/16] 0.0, 128
    %142 = vxpose.xlu0.b32.cont [9/16] 0.0, 128
    %143 = vxpose.xlu0.b32.cont [10/16] 0.0, 128
    %144 = vxpose.xlu0.b32.cont [11/16] 0.0, 128
    %145 = vxpose.xlu0.b32.cont [12/16] 0.0, 128
    %146 = vxpose.xlu0.b32.cont [13/16] 0.0, 128
    %147 = vxpose.xlu0.b32.cont [14/16] 0.0, 128
    %148 = vxpose.xlu0.b32.cont [15/16] 0.0, 128
    %149 = vxpose.xlu0.b32.end [16/16] 0.0, 128
    %v150 = vpop.trf.xlu0
    %v151 = vpop.trf.xlu0
    %v152 = vpop.trf.xlu0
    %v153 = vpop.trf.xlu0
    %v154 = vpop.trf.xlu0
    %v155 = vpop.trf.xlu0
    %v156 = vpop.trf.xlu0
    %v157 = vpop.trf.xlu0
    %v158 = vpop.trf.xlu0
    %v159 = vpop.trf.xlu0
    %v160 = vpop.trf.xlu0
    %v161 = vpop.trf.xlu0
    %v162 = vpop.trf.xlu0
    %v163 = vpop.trf.xlu0
    %v164 = vpop.trf.xlu0
    %v165 = vpop.trf.xlu0
    %vm166 = vcmask 64512
    %v168 = vsel %vm166, %v150, 0
    %170 = vmatprep.subr.mxu0 0.0
    %171 = vmatpush1.msra.mxu0 %v21
    %172 = vmatprep.subr.mxu0 0.0
    %173 = vmatpush1.msra.mxu0 0.0
    %174 = vmatprep.subr.mxu0 0.0
    %175 = vmatpush1.msra.mxu0 0.0
    %176 = vmatprep.subr.mxu0 0.0
    %177 = vmatpush1.msra.mxu0 0.0
    %178 = vmatprep.subr.mxu0 0.0
    %179 = vmatpush1.msra.mxu0 0.0
    %180 = vmatprep.subr.mxu0 0.0
    %181 = vmatpush1.msra.mxu0 0.0
    %182 = vmatprep.subr.mxu0 0.0
    %183 = vmatpush1.msra.mxu0 0.0
    %184 = vmatprep.subr.mxu0 0.0
    %185 = vmatpush1.msra.mxu0 0.0
    %186 = vmatprep.subr.mxu0 0.0
    %187 = vmatpush1.msra.mxu0 0.0
    %188 = vmatprep.subr.mxu0 0.0
    %189 = vmatpush1.msra.mxu0 0.0
    %190 = vmatprep.subr.mxu0 0.0
    %191 = vmatpush1.msra.mxu0 0.0
    %192 = vmatprep.subr.mxu0 0.0
    %193 = vmatpush1.msra.mxu0 0.0
    %194 = vmatprep.subr.mxu0 0.0
    %195 = vmatpush1.msra.mxu0 0.0
    %196 = vmatprep.subr.mxu0 0.0
    %197 = vmatpush1.msra.mxu0 0.0
    %198 = vmatprep.subr.mxu0 0.0
    %199 = vmatpush1.msra.mxu0 0.0
    %200 = vmatprep.subr.mxu0 0.0
    %201 = vmatpush1.msra.mxu0 0.0
    %202 = vmatprep.subr.mxu0 0.0
    %203 = vmatpush1.msra.mxu0 0.0
    %204 = vmatprep.subr.mxu0 0.0
    %205 = vmatpush1.msra.mxu0 0.0
    %206 = vmatprep.subr.mxu0 0.0
    %207 = vmatpush1.msra.mxu0 0.0
    %208 = vmatprep.subr.mxu0 0.0
    %209 = vmatpush1.msra.mxu0 0.0
    %210 = vmatprep.subr.mxu0 0.0
    %211 = vmatpush1.msra.mxu0 0.0
    %212 = vmatprep.subr.mxu0 0.0
    %213 = vmatpush1.msra.mxu0 0.0
    %214 = vmatprep.subr.mxu0 0.0
    %215 = vmatpush1.msra.mxu0 0.0
    %216 = vmatprep.subr.mxu0 0.0
    %217 = vmatpush1.msra.mxu0 0.0
    %218 = vmatprep.subr.mxu0 0.0
    %219 = vmatpush1.msra.mxu0 0.0
    %220 = vmatprep.subr.mxu0 0.0
    %221 = vmatpush1.msra.mxu0 0.0
    %222 = vmatprep.subr.mxu0 0.0
    %223 = vmatpush1.msra.mxu0 0.0
    %224 = vmatprep.subr.mxu0 0.0
    %225 = vmatpush1.msra.mxu0 0.0
    %226 = vmatprep.subr.mxu0 0.0
    %227 = vmatpush1.msra.mxu0 0.0
    %228 = vmatprep.subr.mxu0 0.0
    %229 = vmatpush1.msra.mxu0 0.0
    %230 = vmatprep.subr.mxu0 0.0
    %231 = vmatpush1.msra.mxu0 0.0
    %232 = vmatprep.subr.mxu0 0.0
    %233 = vmatpush1.msra.mxu0 0.0
    %234 = vmatprep.mubr.f32.mxu0 0.0
    %235 = vmatmul.mubr.f32.gmra.mrb[0].mxu0 %v168
    %v236 = vpop.f32.mrb[0].mxu0
    %v237 = vadd.f32 0.0, %v236
    %v238 = vpop.f32.mrb[0].mxu0
    %239 = vdwg.mxu0
    %v240 = vld [vmem:[#allocation4] sm:$0x1]
    %242 = vset.pattern.permute.xlu0 0
    %243 = vperm.xlu0 %242, %v112
    %v244 = vpop.permute.xlu0 %243
    %v246 = vlaneseq
    %v247 = vshrl.u32 %v246, 7
    %v248 = vsub.s32 0, %v247
    %v249 = vrot.slane %v244, %v248
    %v250 = vmul.f32 %v249, %v240
    %v251 = vadd.f32 %v250, %v237
    %vm252 = vcmask 253952
    %253 = vst.msk [vmem:[#allocation4] sm:$0x1] %vm252, %v251
    %254 = vst.msk [vmem:[#allocation2] sm:$0x1] %vm132, %v109
    // Predicated region
    $region14: #{tpu_custom_call.1} parent=1 // pred_check
      %p255 = pneg %p12
    $region15: #{tpu_custom_call.1} parent=1 // pred_check_branch
      %257 = sbr.rel (%p255) target = $region17
    $region16: #{tpu_custom_call.1} parent=1 // pred_region
      %v258 = vld [vmem:[#allocation3] sm:$0x1]
      %v259 = vrcp.pop %v258
      %v260 = vld [vmem:[#allocation4] sm:$0x1]
      %262 = vset.pattern.permute.xlu0 0
      %263 = vperm.xlu0 %262, %v259
      %v264 = vpop.permute.xlu0 %263
      %v266 = vlaneseq
      %v267 = vshrl.u32 %v266, 7
      %v268 = vsub.s32 0, %v267
      %v269 = vrot.slane %v264, %v268
      %v270 = vmul.f32 %v260, %v269
      %271 = vst.msk [vmem:[#allocation5] sm:$0x1] %vm252, %v270
    $region17: #{tpu_custom_call.1} parent=1 // pred_fallthru
      _
    // Predicated region
    $region18: #{tpu_custom_call.1} parent=1 // pred_check
      _
    $region19: #{tpu_custom_call.1} parent=1 // pred_check_branch
      %273 = sbr.rel (0) target = $region21
    $region20: #{tpu_custom_call.1} parent=1 // pred_region
      %s275 = ssub.s32 16, 16
      %276 = vsyncadd [#allocation6], %s275
      %s278 = sshll.u32 [#allocation5], 4
      %s279 = int_to_ptr.vmem [resolvable:$true] %s278
      %281 = dma.vmem_to_hbm [thread:$0]  %s279, 16, %s2, [#allocation6]
    $region21: #{tpu_custom_call.1} parent=1 // pred_fallthru
      _
    // Predicated region
    $region22: #{tpu_custom_call.1} parent=1 // pred_check
      _
    $region23: #{tpu_custom_call.1} parent=1 // pred_check_branch
      %283 = sbr.rel (0) target = $region25
    $region24: #{tpu_custom_call.1} parent=1 // pred_region
      %284 = dma.done [#allocation6], 16
    $region25: #{tpu_custom_call.1} parent=1 // pred_fallthru
      _
    %285 = vsyncpa [#allocation6], 1

</llo_original>
